<compile_context>
chip_gen: v7x
topology: tpu7x:2x2x1
jax: 0.10.0
libtpu: 0.0.40
codegen_flags: <defaults>
</compile_context>

<pallas_src>
import functools

import jax
import jax.numpy as jnp
from jax.experimental import pallas as pl
from jax.experimental.pallas import tpu as pltpu

N_TAYLOR = 2          # TaylorSoftmax order (must be even)
SMOOTHING = 0.05
LS_CLASSES = 5        # LabelSmoothingLoss(5, ...) — hard-coded like the PyTorch module
CONFIDENCE = 1.0 - SMOOTHING
FILL_VALUE = SMOOTHING / (LS_CLASSES - 1)


def taylor_ce_kernel(logits_ref, labels_ref, out_ref, acc_ref, *,
                     n_rows_total, tile_cols, tiles_per_split):
    """logits_ref: (C, TILE) block, labels_ref: (1, TILE) block,
    out_ref: (1,1) SMEM per-split partial, acc_ref: (1, TILE) VMEM accumulator."""
    split = pl.program_id(0)      # "parallel" axis (megacore split)
    step = pl.program_id(1)       # "arbitrary" reduction axis over row tiles

    @pl.when(step == 0)
    def _init():
        acc_ref[...] = jnp.zeros_like(acc_ref)

    x = logits_ref[...].astype(jnp.float32)          # (C, TILE): classes on sublanes
    n_cls, tm = x.shape

    # --- TaylorSoftmax numerator, Horner form: fn = 1 + x + x^2/2 (>= 0.5) ------
    fn = 1.0 + x * (1.0 + 0.5 * x)

    # --- ls = log(TaylorSoftmax). The outer log_softmax in LabelSmoothingLoss is
    #     the identity here because p sums to 1 per row, so ls == log(p). ---------
    sum_fn = jnp.sum(fn, axis=0, keepdims=True)      # (1, TILE) sublane reduction
    ls = jnp.log(fn) - jnp.log(sum_fn)               # (C, TILE)

    # --- label-smoothed loss without materializing true_dist --------------------
    labels = labels_ref[...]                                        # (1, TILE) int32
    cls_iota = jax.lax.broadcasted_iota(jnp.int32, (n_cls, tm), 0)  # class index
    ls_at_label = jnp.sum(jnp.where(cls_iota == labels, ls, 0.0),
                          axis=0, keepdims=True)                    # (1, TILE)
    sum_ls = jnp.sum(ls, axis=0, keepdims=True)                     # (1, TILE)
    per_row = -(jnp.float32(FILL_VALUE) * sum_ls
                + jnp.float32(CONFIDENCE - FILL_VALUE) * ls_at_label)

    # --- mask padded lanes of ragged edge tiles / phantom (clamped) tiles -------
    tile_idx = split * tiles_per_split + step
    global_col = (jax.lax.broadcasted_iota(jnp.int32, (1, tm), 1)
                  + tile_idx * tile_cols)
    per_row = jnp.where(global_col < n_rows_total, per_row, jnp.float32(0.0))

    # lane-resident accumulation: cheap VPU add; single XLU reduce only at the end
    acc_ref[...] += per_row

    @pl.when(step == pl.num_programs(1) - 1)
    def _finalize():
        out_ref[0, 0] = jnp.sum(acc_ref[...])


def taylor_cross_entropy_loss(logits, labels, *, tile_cols=16384, num_splits=2):
    """logits: (N, C) float, labels: (N,) int -> scalar float32 loss (mean over rows)."""
    n, n_cls = logits.shape
    assert n_cls == LS_CLASSES, "LabelSmoothingLoss in the spec is hard-coded to 5 classes"

    # lane-dense layout: (C, N) with rows on the 128-lane axis; keep input dtype.
    # (Kept as a wrapper transpose — see header comment for why in-kernel alternatives lose.)
    logits_t = jnp.transpose(logits)                        # (C, N)
    labels2d = labels.astype(jnp.int32).reshape(1, -1)      # (1, N)

    # big tile (amortizes per-step overhead), clamped down + 128-aligned for small N
    tile = max(128, min(int(tile_cols), pl.cdiv(n, 128) * 128))
    num_tiles = pl.cdiv(n, tile)
    n_splits = max(1, min(int(num_splits), num_tiles))      # v7x: 2 TCs; no-op on v5e/v6e
    tiles_per_split = pl.cdiv(num_tiles, n_splits)

    def col_index(i, j):
        # clamp phantom tiles (from uneven split) onto the last real tile;
        # the kernel-side mask (based on the *intended* tile index) zeroes them out.
        return jnp.minimum(i * tiles_per_split + j, num_tiles - 1)

    kernel = functools.partial(taylor_ce_kernel, n_rows_total=n,
                               tile_cols=tile, tiles_per_split=tiles_per_split)

    partials = pl.pallas_call(
        kernel,
        out_shape=jax.ShapeDtypeStruct((n_splits, 1), jnp.float32),
        grid=(n_splits, tiles_per_split),
        in_specs=[
            pl.BlockSpec((n_cls, tile), lambda i, j: (0, col_index(i, j))),
            pl.BlockSpec((1, tile), lambda i, j: (0, col_index(i, j))),
        ],
        out_specs=pl.BlockSpec((1, 1), lambda i, j: (i, 0),
                               memory_space=pltpu.MemorySpace.SMEM),
        scratch_shapes=[pltpu.VMEM((1, tile), jnp.float32)],
        compiler_params=pltpu.CompilerParams(
            dimension_semantics=("parallel", "arbitrary")),
    )(logits_t, labels2d)

    return jnp.sum(partials) / jnp.float32(n)


def _reference(logits, labels):
    """Pure-JAX reference mirroring the PyTorch forward (keeps the second log_softmax)."""
    x = logits.astype(jnp.float32)
    fn = jnp.ones_like(x)
    denor = 1.0
    for i in range(1, N_TAYLOR + 1):
        denor *= float(i)
        fn = fn + (x ** i) / denor
    p = fn / jnp.sum(fn, axis=1, keepdims=True)
    lp = jnp.log(p)
    ls = jax.nn.log_softmax(lp, axis=-1)
    onehot = jax.nn.one_hot(labels, ls.shape[1], dtype=ls.dtype)
    true_dist = FILL_VALUE * (1.0 - onehot) + CONFIDENCE * onehot
    return jnp.mean(jnp.sum(-true_dist * ls, axis=-1))


if __name__ == "__main__":
    key = jax.random.PRNGKey(0)
    k1, k2, k3, k4 = jax.random.split(key, 4)

    # small shape consistent with the module: (batch=8, classes=5), default big-tile path
    logits = jax.random.normal(k1, (8, LS_CLASSES), dtype=jnp.float32)
    labels = jax.random.randint(k2, (8,), 0, LS_CLASSES, dtype=jnp.int32)
    loss = jax.block_until_ready(taylor_cross_entropy_loss(logits, labels))
    ref = jax.block_until_ready(_reference(logits, labels))
    assert jnp.allclose(loss, ref, atol=1e-5, rtol=1e-5), (loss, ref)

    # second case: small tile override to exercise multiple grid tiles, the two-way
    # "parallel" split, the phantom-tile clamp and ragged last-tile masking (no pad)
    logits2 = jax.random.normal(k3, (700, LS_CLASSES), dtype=jnp.float32)
    labels2 = jax.random.randint(k4, (700,), 0, LS_CLASSES, dtype=jnp.int32)
    loss2 = jax.block_until_ready(
        taylor_cross_entropy_loss(logits2, labels2, tile_cols=256, num_splits=2))
    ref2 = jax.block_until_ready(_reference(logits2, labels2))
    assert jnp.allclose(loss2, ref2, atol=1e-5, rtol=1e-5), (loss2, ref2)

    # third case: default tile on the same data (single ragged edge block, no pad)
    loss3 = jax.block_until_ready(taylor_cross_entropy_loss(logits2, labels2))
    assert jnp.allclose(loss3, ref2, atol=1e-5, rtol=1e-5), (loss3, ref2)

    print("KERNEL_OK")
</pallas_src>

<mosaic_0001>
module attributes {stable_mosaic.version = 11 : i64} {
  func.func @taylor_ce_kernel(%arg0: i32, %arg1: i32, %arg2: memref<5x128xf32, #tpu.memory_space<vmem>>, %arg3: memref<1x128xi32, #tpu.memory_space<vmem>>, %arg4: memref<1x1xf32, #tpu.memory_space<smem>>, %arg5: memref<1x128xf32, #tpu.memory_space<vmem>>) attributes {dimension_semantics = [#tpu.dimension_semantics<parallel>, #tpu.dimension_semantics<arbitrary>], iteration_bounds = array<i64: 1, 1>, scalar_prefetch = 0 : i64, scratch_operands = 1 : i64, tpu.core_type = #tpu.core_type<tc>, window_params = [{transform_indices = @transform_0, window_bounds = array<i64: 5, 128>}, {transform_indices = @transform_1, window_bounds = array<i64: 1, 128>}, {transform_indices = @transform_2, window_bounds = array<i64: 1, 1>}]} {
    %c0_i32 = arith.constant 0 : i32
    %0 = arith.cmpi eq, %arg1, %c0_i32 : i32
    %1 = arith.extui %0 : i1 to i32
    %c0_i32_0 = arith.constant 0 : i32
    %2 = arith.cmpi ne, %1, %c0_i32_0 : i32
    scf.if %2 {
      %cst_20 = arith.constant 0.000000e+00 : f32
      %50 = vector.broadcast %cst_20 : f32 to vector<1x128xf32>
      %c0_21 = arith.constant 0 : index
      %c0_22 = arith.constant 0 : index
      %51 = vector.load %arg5[%c0_21, %c0_22] : memref<1x128xf32, #tpu.memory_space<vmem>>, vector<1x128xf32>
      tpu.vector_store %arg5[%c0_21, %c0_22], %50 {strides = array<i32>} : memref<1x128xf32, #tpu.memory_space<vmem>>, vector<1x128xf32>,
    } else {
    }
    %c0 = arith.constant 0 : index
    %c0_1 = arith.constant 0 : index
    %3 = vector.load %arg2[%c0, %c0_1] : memref<5x128xf32, #tpu.memory_space<vmem>>, vector<5x128xf32>
    %cst = arith.constant 5.000000e-01 : f32
    %4 = vector.broadcast %cst : f32 to vector<5x128xf32>
    %5 = arith.mulf %4, %3 : vector<5x128xf32>
    %cst_2 = arith.constant 1.000000e+00 : f32
    %6 = vector.broadcast %cst_2 : f32 to vector<5x128xf32>
    %7 = arith.addf %6, %5 : vector<5x128xf32>
    %8 = arith.mulf %3, %7 : vector<5x128xf32>
    %cst_3 = arith.constant 1.000000e+00 : f32
    %9 = vector.broadcast %cst_3 : f32 to vector<5x128xf32>
    %10 = arith.addf %9, %8 : vector<5x128xf32>
    %cst_4 = arith.constant dense<0.000000e+00> : vector<128xf32>
    %11 = vector.multi_reduction <add>, %10, %cst_4 [0] : vector<5x128xf32> to vector<128xf32>
    %12 = vector.shape_cast %11 : vector<128xf32> to vector<1x128xf32>
    %13 = math.log %10 : vector<5x128xf32>
    %14 = math.log %12 : vector<1x128xf32>
    %15 = vector.broadcast %14 : vector<1x128xf32> to vector<5x128xf32>
    %16 = arith.subf %13, %15 : vector<5x128xf32>
    %c0_5 = arith.constant 0 : index
    %c0_6 = arith.constant 0 : index
    %17 = vector.load %arg3[%c0_5, %c0_6] : memref<1x128xi32, #tpu.memory_space<vmem>>, vector<1x128xi32>
    %18 = tpu.iota {dimensions = array<i32: 0>} : vector<5x128xi32>
    %19 = vector.broadcast %17 : vector<1x128xi32> to vector<5x128xi32>
    %20 = arith.cmpi eq, %18, %19 : vector<5x128xi32>
    %cst_7 = arith.constant 0.000000e+00 : f32
    %21 = vector.broadcast %cst_7 : f32 to vector<5x128xf32>
    %22 = arith.select %20, %16, %21 : vector<5x128xi1>, vector<5x128xf32>
    %cst_8 = arith.constant dense<0.000000e+00> : vector<128xf32>
    %23 = vector.multi_reduction <add>, %22, %cst_8 [0] : vector<5x128xf32> to vector<128xf32>
    %24 = vector.shape_cast %23 : vector<128xf32> to vector<1x128xf32>
    %cst_9 = arith.constant dense<0.000000e+00> : vector<128xf32>
    %25 = vector.multi_reduction <add>, %16, %cst_9 [0] : vector<5x128xf32> to vector<128xf32>
    %26 = vector.shape_cast %25 : vector<128xf32> to vector<1x128xf32>
    %cst_10 = arith.constant 1.250000e-02 : f32
    %27 = vector.broadcast %cst_10 : f32 to vector<1x128xf32>
    %28 = arith.mulf %27, %26 : vector<1x128xf32>
    %cst_11 = arith.constant 9.375000e-01 : f32
    %29 = vector.broadcast %cst_11 : f32 to vector<1x128xf32>
    %30 = arith.mulf %29, %24 : vector<1x128xf32>
    %31 = arith.addf %28, %30 : vector<1x128xf32>
    %cst_12 = arith.constant 0.000000e+00 : f32
    %32 = vector.broadcast %cst_12 : f32 to vector<1x128xf32>
    %33 = arith.subf %32, %31 : vector<1x128xf32>
    %c1_i32 = arith.constant 1 : i32
    %34 = arith.muli %arg0, %c1_i32 : i32
    %35 = arith.addi %34, %arg1 : i32
    %36 = tpu.iota {dimensions = array<i32: 1>} : vector<1x128xi32>
    %c128_i32 = arith.constant 128 : i32
    %37 = arith.muli %35, %c128_i32 : i32
    %38 = vector.broadcast %37 : i32 to vector<1x128xi32>
    %39 = arith.addi %36, %38 : vector<1x128xi32>
    %c8_i32 = arith.constant 8 : i32
    %40 = vector.broadcast %c8_i32 : i32 to vector<1x128xi32>
    %41 = arith.cmpi slt, %39, %40 : vector<1x128xi32>
    %cst_13 = arith.constant 0.000000e+00 : f32
    %42 = vector.broadcast %cst_13 : f32 to vector<1x128xf32>
    %43 = arith.select %41, %33, %42 : vector<1x128xi1>, vector<1x128xf32>
    %c0_14 = arith.constant 0 : index
    %c0_15 = arith.constant 0 : index
    %44 = vector.load %arg5[%c0_14, %c0_15] : memref<1x128xf32, #tpu.memory_space<vmem>>, vector<1x128xf32>
    %45 = arith.addf %44, %43 : vector<1x128xf32>
    %c0_16 = arith.constant 0 : index
    %c0_17 = arith.constant 0 : index
    %46 = vector.load %arg5[%c0_16, %c0_17] : memref<1x128xf32, #tpu.memory_space<vmem>>, vector<1x128xf32>
    tpu.vector_store %arg5[%c0_16, %c0_17], %45 {strides = array<i32>} : memref<1x128xf32, #tpu.memory_space<vmem>>, vector<1x128xf32>,
    %c0_i32_18 = arith.constant 0 : i32
    %47 = arith.cmpi eq, %arg1, %c0_i32_18 : i32
    %48 = arith.extui %47 : i1 to i32
    %c0_i32_19 = arith.constant 0 : i32
    %49 = arith.cmpi ne, %48, %c0_i32_19 : i32
    scf.if %49 {
      %c0_20 = arith.constant 0 : index
      %c0_21 = arith.constant 0 : index
      %50 = vector.load %arg5[%c0_20, %c0_21] : memref<1x128xf32, #tpu.memory_space<vmem>>, vector<1x128xf32>
      %51 = vector.shape_cast %50 : vector<1x128xf32> to vector<1x1x128xf32>
      %cst_22 = arith.constant dense<0.000000e+00> : vector<1xf32>
      %52 = vector.multi_reduction <add>, %51, %cst_22 [1, 2] : vector<1x1x128xf32> to vector<1xf32>
      %53 = vector.shape_cast %52 : vector<1xf32> to vector<1x1x1xf32>
      %54 = vector.extract %53[0, 0, 0] : f32 from vector<1x1x1xf32>
      %c0_23 = arith.constant 0 : index
      %c0_24 = arith.constant 0 : index
      %55 = memref.load %arg4[%c0_23, %c0_24] : memref<1x1xf32, #tpu.memory_space<smem>>
      memref.store %54, %arg4[%c0_23, %c0_24] : memref<1x1xf32, #tpu.memory_space<smem>>
    } else {
    }
    return
  }
  func.func @transform_0(%arg0: i32, %arg1: i32) -> (i32, i32) {
    %c1_i32 = arith.constant 1 : i32
    %0 = arith.muli %arg0, %c1_i32 : i32
    %1 = arith.addi %0, %arg1 : i32
    %c0_i32 = arith.constant 0 : i32
    %2 = arith.minsi %1, %c0_i32 : i32
    %c0_i32_0 = arith.constant 0 : i32
    %c0_i32_1 = arith.constant 0 : i32
    return %c0_i32_0, %2 : i32, i32
  }
  func.func @transform_1(%arg0: i32, %arg1: i32) -> (i32, i32) {
    %c1_i32 = arith.constant 1 : i32
    %0 = arith.muli %arg0, %c1_i32 : i32
    %1 = arith.addi %0, %arg1 : i32
    %c0_i32 = arith.constant 0 : i32
    %2 = arith.minsi %1, %c0_i32 : i32
    %c0_i32_0 = arith.constant 0 : i32
    %c0_i32_1 = arith.constant 0 : i32
    return %c0_i32_0, %2 : i32, i32
  }
  func.func @transform_2(%arg0: i32, %arg1: i32) -> (i32, i32) {
    %c0_i32 = arith.constant 0 : i32
    %c0_i32_0 = arith.constant 0 : i32
    return %arg0, %c0_i32 : i32, i32
  }
}

</mosaic_0001>

<llo_original>
// kernel: tpu_custom_call.1
$region0: #{tpu_custom_call.1}
  #allocation0 [shape = 'u32[]', space=smem, size = 0x4, offset = 0x4, fixed_abs, tag = 'smem constant byte address 0x4 - core index']
  #allocation1 [shape = 'u32[144,128]{1,0:T(1,128)}', space=vmem, size = 0x12000, scoped, tag = 'internal scratch']
  #allocation2 [shape = 'f32[1,128]{1,0:T(1,128)}', space=vmem, size = 0x200, scoped, tag = 'scratch operand']
  %s0 = inlined_call_operand.hbm [shape: f32[5,8], index: 0, kind: input, shape index: {}]
  %s1 = inlined_call_operand.vmem [shape: s32[1,8], index: 1, kind: input, shape index: {}]
  %s2 = inlined_call_operand.hbm [shape: f32[1,1], index: 2, kind: output, shape index: {}]
  %s3 = sld [smem:[#allocation0]]
  $region30: #{tpu_custom_call.1} parent=0
    _
  %s5 = ssub.s32 1, %s3
  %s6 = scalar_select 0, %s5, %s3
  $region1: #{tpu_custom_call.1} parent=0
    #allocation3 [shape = 'u8[4096]{0}', space=vmem, size = 0x1000, scoped, tag = 'input window, operand 0, single buffered']
    #allocation4 [shape = 's32[1]{0}', space=sflag, size = 0x4, scoped, tag = 'scoped memory for tpu_custom_call.1']
    #allocation5 [shape = 's32[1]{0}', space=sflag, size = 0x4, scoped, tag = 'scoped memory for tpu_custom_call.1']
    #allocation6 [shape = 'u8[512]{0}', space=smem, size = 0x200, scoped, tag = 'output window, operand 0, single buffered']
    %7 = vsyncpa [#allocation4], 0
    %8 = vsyncpa [#allocation5], 0
    // Predicated region
    $region2: #{tpu_custom_call.1} parent=1 // pred_check
      _
    $region3: #{tpu_custom_call.1} parent=1 // pred_check_branch
      %10 = sbr.rel (0) target = $region5
    $region4: #{tpu_custom_call.1} parent=1 // pred_region
      %s11 = sadd.s32 0, 0
      %p12 = scmp.lt.s32.totalorder %s11, 0
      %s13 = scalar_select %p12, %s11, 0
      %s15 = ssub.s32 128, 128
      %16 = vsyncadd [#allocation4], %s15
      %s17 = smul.addr %s13, 128
      %s18 = scalar_lea.hbm %s0, %s17
      %s20 = sshll.u32 [#allocation3], 4
      %s21 = int_to_ptr.vmem [resolvable:$true] %s20
      %23 = dma.hbm_to_vmem [thread:$0]  %s18, 128, %s21, [#allocation4]
    $region5: #{tpu_custom_call.1} parent=1 // pred_fallthru
      _
    // Predicated region
    $region6: #{tpu_custom_call.1} parent=1 // pred_check
      _
    $region7: #{tpu_custom_call.1} parent=1 // pred_check_branch
      %25 = sbr.rel (0) target = $region9
    $region8: #{tpu_custom_call.1} parent=1 // pred_region
      %s26 = sadd.s32 0, 0
      %p27 = scmp.lt.s32.totalorder %s26, 0
      %s28 = scalar_select %p27, %s26, 0
      %p29 = scmp.lt.s32.totalorder %s28, 0
      %s30 = scalar_select %p29, %s28, 0
      %s31 = scalar_lea.vmem %s1, %s30
      %s32 = sadd.s32 0, 0
      %p33 = scmp.lt.s32.totalorder %s32, 0
      %s34 = scalar_select %p33, %s32, 0
    $region9: #{tpu_custom_call.1} parent=1 // pred_fallthru
      _
    // Predicated region
    $region10: #{tpu_custom_call.1} parent=1 // pred_check
      _
    $region11: #{tpu_custom_call.1} parent=1 // pred_check_branch
      %36 = sbr.rel (0) target = $region13
    $region12: #{tpu_custom_call.1} parent=1 // pred_region
      %37 = dma.done [#allocation4], 128
    $region13: #{tpu_custom_call.1} parent=1 // pred_fallthru
      _
    %s38 = sadd.s32 0, 0
    %p39 = scmp.lt.s32.totalorder %s38, 0
    %s40 = scalar_select %p39, %s38, 0
    %p41 = scmp.lt.s32.totalorder %s40, 0
    %s42 = scalar_select %p41, %s40, 0
    %s43 = scalar_lea.vmem %s1, %s42
    %s44 = sadd.s32 0, 0
    %p45 = scmp.lt.s32.totalorder %s44, 0
    %s46 = scalar_select %p45, %s44, 0
    %s47 = sadd.s32 0, 0
    %p48 = scmp.lt.s32.totalorder %s47, 0
    %s49 = scalar_select %p48, %s47, 0
    %p50 = scmp.lt.s32.totalorder %s49, 0
    %s51 = scalar_select %p50, %s49, 0
    %s52 = scalar_lea.vmem %s1, %s51
    %s53 = sadd.s32 0, 0
    %p54 = scmp.lt.s32.totalorder %s53, 0
    %s55 = scalar_select %p54, %s53, 0
    %p56 = scmp.eq.s32.totalorder 0, 0
    // Predicated region
    $region14: #{tpu_custom_call.1} parent=1 // pred_check
      %p57 = pneg %p56
    $region15: #{tpu_custom_call.1} parent=1 // pred_check_branch
      %59 = sbr.rel (%p57) target = $region17
    $region16: #{tpu_custom_call.1} parent=1 // pred_region
      %60 = vst [vmem:[#allocation2] sm:$0x1] 0.0
    $region17: #{tpu_custom_call.1} parent=1 // pred_fallthru
      _
    %v61 = vld [vmem:[#allocation3] sm:$0x1f]
    %v62 = vmul.f32 %v61, 0.5
    %v63 = vadd.f32 %v62, 1.0
    %v64 = vmul.f32 %v61, %v63
    %v65 = vadd.f32 %v64, 1.0
    %vm66 = vcmask 1044480
    %v67 = vsel %vm66, %v65, 0.0
    %v68 = vrot.slane %v67, 4
    %v69 = vadd.f32 %v67, %v68
    %v70 = vrot.slane %v69, 2
    %v71 = vadd.f32 %v69, %v70
    %v72 = vrot.slane %v71, 1
    %v73 = vadd.f32 %v71, %v72
    %v74 = vlog2.pop %v65
    %v75 = vmul.f32 %v74, 0.6931472
    %v76 = vlog2.pop %v73
    %v77 = vmul.f32 %v76, 0.6931472
    %v78 = vsub.f32 %v75, %v77
    %v79 = vld [vmem:[%s52] sm:$0x1]
    %v80 = vlaneseq
    %v81 = vshrl.u32 %v80, 7
    %v82 = vlaneseq
    %v83 = vshrl.u32 %v82, 7
    %v84 = vsub.s32 0, %v83
    %v85 = vrot.slane %v79, %v84
    %vm86 = vcmp.eq.s32.totalorder %v81, %v85
    %v87 = vsel %vm86, %v78, 0.0
    %v88 = vsel %vm66, %v87, 0.0
    %v89 = vrot.slane %v88, 4
    %v90 = vadd.f32 %v88, %v89
    %v91 = vrot.slane %v90, 2
    %v92 = vadd.f32 %v90, %v91
    %v93 = vrot.slane %v92, 1
    %v94 = vadd.f32 %v92, %v93
    %v95 = vsel %vm66, %v78, 0.0
    %v96 = vrot.slane %v95, 4
    %v97 = vadd.f32 %v95, %v96
    %v98 = vrot.slane %v97, 2
    %v99 = vadd.f32 %v97, %v98
    %v100 = vrot.slane %v99, 1
    %v101 = vadd.f32 %v99, %v100
    %v102 = vmul.f32 %v101, 0.0125
    %v103 = vmul.f32 %v94, 0.9375
    %v104 = vadd.f32 %v102, %v103
    %v105 = vsub.f32 0.0, %v104
    %s106 = sadd.s32 0, 0
    %v107 = vlaneseq
    %v108 = vand.u32 %v107, 127
    %s109 = smul.u32 %s106, 128
    %v110 = vstv %s109
    %v111 = vadd.s32 %v108, %v110
    %vm112 = vcmp.lt.s32.totalorder %v111, 8
    %v113 = vsel %vm112, %v105, 0.0
    %v114 = vld [vmem:[#allocation2] sm:$0x1]
    %v115 = vadd.f32 %v114, %v113
    %116 = vst [vmem:[#allocation2] sm:$0x1] %v115
    // Predicated region
    $region18: #{tpu_custom_call.1} parent=1 // pred_check
      %p117 = pneg %p56
    $region19: #{tpu_custom_call.1} parent=1 // pred_check_branch
      %119 = sbr.rel (%p117) target = $region21
    $region20: #{tpu_custom_call.1} parent=1 // pred_region
      %v120 = vld [vmem:[#allocation2] sm:$0x1]
      %vm121 = vcmask 1040384
      %v122 = vsel %vm121, %v120, 0.0
      %123 = vadd.xlane.f32.xlu0 %v122
      %v124 = vpop.xlane.xlu0 %123
      %v125 = vrot.slane %v124, 4
      %v126 = vadd.f32 %v124, %v125
      %v127 = vrot.slane %v126, 2
      %v128 = vadd.f32 %v126, %v127
      %v129 = vrot.slane %v128, 1
      %v130 = vadd.f32 %v128, %v129
      %s131 = vtos %v130
      %s132 = scalar_lea.smem [#allocation6], 0
      %133 = sst [smem:[%s132]] %s131
    $region21: #{tpu_custom_call.1} parent=1 // pred_fallthru
      _
    // Predicated region
    $region22: #{tpu_custom_call.1} parent=1 // pred_check
      _
    $region23: #{tpu_custom_call.1} parent=1 // pred_check_branch
      %135 = sbr.rel (0) target = $region25
    $region24: #{tpu_custom_call.1} parent=1 // pred_region
      %s137 = ssub.s32 16, 16
      %138 = vsyncadd [#allocation5], %s137
      %141 = dma.smem_to_hbm [#allocation6], 16, %s2, [#allocation5]
    $region25: #{tpu_custom_call.1} parent=1 // pred_fallthru
      _
    // Predicated region
    $region26: #{tpu_custom_call.1} parent=1 // pred_check
      _
    $region27: #{tpu_custom_call.1} parent=1 // pred_check_branch
      %143 = sbr.rel (0) target = $region29
    $region28: #{tpu_custom_call.1} parent=1 // pred_region
      %144 = dma.done [#allocation5], 16
    $region29: #{tpu_custom_call.1} parent=1 // pred_fallthru
      _
    %145 = sfence
    %146 = vsyncpa [#allocation4], 1
    %147 = vsyncpa [#allocation5], 1

</llo_original>
